<compile_context>
chip_gen: v7x
topology: tpu7x:2x2x1
jax: 0.10.0
libtpu: 0.0.40
codegen_flags: <defaults>
</compile_context>

<pallas_src>
import functools

import jax
import jax.numpy as jnp
from jax.experimental import pallas as pl
from jax.experimental.pallas import tpu as pltpu

_BN_EPS = 1e-5


def _round_up(n, m):
    return (n + m - 1) // m * m


# ---------------------------------------------------------------------------
# Pass 1: BatchNorm1d batch statistics -> fused per-feature scale / shift.
#   scale = gamma * rsqrt(var + eps);  shift = beta - mean * scale
# The (2, D) output block is resident across the (reduction) grid axis and doubles as
# the accumulator: row 0 = sum, row 1 = sumsq, overwritten with scale/shift at the end.
# ---------------------------------------------------------------------------
def _bn_stats_kernel(x_ref, gamma_ref, beta_ref, ss_ref, *, batch):
    @pl.when(pl.program_id(0) == 0)
    def _():
        ss_ref[...] = jnp.zeros_like(ss_ref)

    x = x_ref[...]
    ss_ref[0:1, :] += jnp.sum(x, axis=0, keepdims=True)
    ss_ref[1:2, :] += jnp.sum(x * x, axis=0, keepdims=True)

    @pl.when(pl.program_id(0) == pl.num_programs(0) - 1)
    def _():
        inv_b = 1.0 / batch                                  # trace-time constant
        mean = ss_ref[0:1, :] * inv_b
        var = ss_ref[1:2, :] * inv_b - mean * mean           # biased variance, one pass
        scale = gamma_ref[...] * jax.lax.rsqrt(var + _BN_EPS)
        shift = beta_ref[...] - mean * scale
        ss_ref[0:1, :] = scale
        ss_ref[1:2, :] = shift


# ---------------------------------------------------------------------------
# Pass 2: normalize + 3 Linear layers (+ReLU/+Sigmoid) for one batch tile.
# ---------------------------------------------------------------------------
def _mlp_kernel(x_ref, ss_ref, w1_ref, b1_ref, w2_ref, b2_ref, w3_ref, b3_ref, o_ref):
    x = x_ref[...]
    xn = x * ss_ref[0:1, :] + ss_ref[1:2, :]                 # fused BatchNorm (2 VPU ops/elem)

    h1 = jnp.dot(xn.astype(jnp.bfloat16), w1_ref[...],
                 preferred_element_type=jnp.float32) + b1_ref[...]
    h1 = jnp.maximum(h1, 0.0)

    h2 = jnp.dot(h1.astype(jnp.bfloat16), w2_ref[...],
                 preferred_element_type=jnp.float32) + b2_ref[...]
    h2 = jnp.maximum(h2, 0.0)

    logits = jnp.dot(h2.astype(jnp.bfloat16), w3_ref[...],
                     preferred_element_type=jnp.float32) + b3_ref[...]
    o_ref[...] = jax.nn.sigmoid(logits)                      # f32 sigmoid + f32 store


def neural_regression_forward(x, params, *, tile_batch=None):
    """x: (B, input_dim) f32.  params: gamma/beta (f32), w1/w2/w3 ((in,out) bf16), b1/b2/b3 (f32)."""
    B, D = x.shape
    H = params["w1"].shape[1]
    T = params["w3"].shape[1]

    # Batch tile: largest reasonable tile, 8-row aligned (sublane).  At these feature
    # widths a (1024, D) f32 tile is well under 1 MiB, so the same tile fits the 64 MiB
    # VMEM of v7x as comfortably as the 128 MiB of v5e/v6e — no per-generation split needed.
    if tile_batch is None:
        tile_batch = min(1024, _round_up(B, 8))
    TB = _round_up(tile_batch, 8)
    B_pad = _round_up(B, TB)
    if B_pad != B:
        x = jnp.pad(x, ((0, B_pad - B), (0, 0)))             # zero rows; sliced off below
    n_tiles = B_pad // TB

    def resident(shape):
        return pl.BlockSpec(shape, lambda i: (0, 0))

    # --- Pass 1: whole-batch statistics -> (2, D) [scale; shift] ---
    scale_shift = pl.pallas_call(
        functools.partial(_bn_stats_kernel, batch=float(B)),
        out_shape=jax.ShapeDtypeStruct((2, D), jnp.float32),
        grid_spec=pltpu.PrefetchScalarGridSpec(
            num_scalar_prefetch=0,
            grid=(n_tiles,),
            in_specs=[pl.BlockSpec((TB, D), lambda i: (i, 0)),
                      resident((1, D)),
                      resident((1, D))],
            out_specs=resident((2, D)),
        ),
        compiler_params=pltpu.CompilerParams(dimension_semantics=("arbitrary",)),
    )(x, params["gamma"], params["beta"])

    # --- Pass 2: tiled MLP; batch axis "parallel" (megacore sharding on v7x) ---
    # NOTE: out tile is (TB, T) with T=4 (< 128 lanes -> masked stores).  A lane-dense
    # repack was considered but skipped to keep lowering simple and HBM writeback minimal.
    out = pl.pallas_call(
        _mlp_kernel,
        out_shape=jax.ShapeDtypeStruct((B_pad, T), jnp.float32),
        grid_spec=pltpu.PrefetchScalarGridSpec(
            num_scalar_prefetch=0,
            grid=(n_tiles,),
            in_specs=[pl.BlockSpec((TB, D), lambda i: (i, 0)),
                      resident((2, D)),
                      resident((D, H)), resident((1, H)),
                      resident((H, H)), resident((1, H)),
                      resident((H, T)), resident((1, T))],
            out_specs=pl.BlockSpec((TB, T), lambda i: (i, 0)),
        ),
        compiler_params=pltpu.CompilerParams(dimension_semantics=("parallel",)),
    )(x, scale_shift,
      params["w1"], params["b1"],
      params["w2"], params["b2"],
      params["w3"], params["b3"])

    return out[:B] if B_pad != B else out


def init_params(key, input_dim, hidden_dim, target_size):
    """PyTorch-style init.  Linear weights stored pre-transposed (in, out) and cast to bf16
    (MXU-native, halves resident-weight DMA bytes); biases / gamma / beta stay f32."""
    ks = jax.random.split(key, 6)

    def lin(kw, kb, fan_in, fan_out):
        bound = 1.0 / jnp.sqrt(fan_in)
        w = jax.random.uniform(kw, (fan_in, fan_out), jnp.float32, -bound, bound)
        b = jax.random.uniform(kb, (1, fan_out), jnp.float32, -bound, bound)
        return w.astype(jnp.bfloat16), b

    w1, b1 = lin(ks[0], ks[1], input_dim, hidden_dim)
    w2, b2 = lin(ks[2], ks[3], hidden_dim, hidden_dim)
    w3, b3 = lin(ks[4], ks[5], hidden_dim, target_size)
    return {
        "gamma": jnp.ones((1, input_dim), jnp.float32),   # BatchNorm1d weight init
        "beta": jnp.zeros((1, input_dim), jnp.float32),   # BatchNorm1d bias init
        "w1": w1, "b1": b1,
        "w2": w2, "b2": b2,
        "w3": w3, "b3": b3,
    }


def _reference_forward(x, params):
    """Pure-JAX f32 reference (training-mode BatchNorm semantics)."""
    xf = x.astype(jnp.float32)
    mean = jnp.mean(xf, axis=0, keepdims=True)
    var = jnp.mean(xf * xf, axis=0, keepdims=True) - mean * mean
    xn = (xf - mean) * jax.lax.rsqrt(var + _BN_EPS)
    xn = xn * params["gamma"] + params["beta"]
    h1 = jnp.maximum(xn @ params["w1"].astype(jnp.float32) + params["b1"], 0.0)
    h2 = jnp.maximum(h1 @ params["w2"].astype(jnp.float32) + params["b2"], 0.0)
    return jax.nn.sigmoid(h2 @ params["w3"].astype(jnp.float32) + params["b3"])


if __name__ == "__main__":
    key = jax.random.PRNGKey(0)
    k_x, k_x2, k_p = jax.random.split(key, 3)

    batch, input_dim, hidden_dim, target_size = 8, 16, 32, 4
    params = init_params(k_p, input_dim, hidden_dim, target_size)

    # Case 1: small batch, single-tile grid.
    x = jax.random.normal(k_x, (batch, input_dim), jnp.float32)
    out = jax.block_until_ready(neural_regression_forward(x, params))
    assert out.shape == (batch, target_size)
    assert bool(jnp.all((out >= 0.0) & (out <= 1.0)))          # sigmoid range sanity
    ref = _reference_forward(x, params)
    assert bool(jnp.allclose(out, ref, atol=5e-2, rtol=5e-2))  # bf16-matmul tolerance

    # Case 2: multi-tile grid + batch padding (B=20 not a multiple of the 8-row tile).
    x2 = jax.random.normal(k_x2, (20, input_dim), jnp.float32)
    out2 = jax.block_until_ready(neural_regression_forward(x2, params, tile_batch=8))
    assert out2.shape == (20, target_size)
    ref2 = _reference_forward(x2, params)
    assert bool(jnp.allclose(out2, ref2, atol=5e-2, rtol=5e-2))

    print("KERNEL_OK")
</pallas_src>

<mosaic_0001>
module attributes {stable_mosaic.version = 11 : i64} {
  func.func @_bn_stats_kernel(%arg0: i32, %arg1: memref<8x16xf32, #tpu.memory_space<vmem>>, %arg2: memref<1x16xf32, #tpu.memory_space<vmem>>, %arg3: memref<1x16xf32, #tpu.memory_space<vmem>>, %arg4: memref<2x16xf32, #tpu.memory_space<vmem>>) attributes {dimension_semantics = [#tpu.dimension_semantics<arbitrary>], iteration_bounds = array<i64: 1>, scalar_prefetch = 0 : i64, scratch_operands = 0 : i64, tpu.core_type = #tpu.core_type<tc>, window_params = [{transform_indices = @transform_0, window_bounds = array<i64: 8, 16>}, {pipeline_mode = #tpu.pipeline_mode<synchronous>, transform_indices = @transform_1, window_bounds = array<i64: 1, 16>}, {pipeline_mode = #tpu.pipeline_mode<synchronous>, transform_indices = @transform_2, window_bounds = array<i64: 1, 16>}, {pipeline_mode = #tpu.pipeline_mode<synchronous>, transform_indices = @transform_3, window_bounds = array<i64: 2, 16>}]} {
    %c0_i32 = arith.constant 0 : i32
    %0 = arith.cmpi eq, %arg0, %c0_i32 : i32
    %1 = arith.extui %0 : i1 to i32
    %c0_i32_0 = arith.constant 0 : i32
    %2 = arith.cmpi ne, %1, %c0_i32_0 : i32
    scf.if %2 {
      %cst_12 = arith.constant 0.000000e+00 : f32
      %18 = vector.broadcast %cst_12 : f32 to vector<2x16xf32>
      %c0_13 = arith.constant 0 : index
      %c0_14 = arith.constant 0 : index
      %19 = vector.load %arg4[%c0_13, %c0_14] : memref<2x16xf32, #tpu.memory_space<vmem>>, vector<2x16xf32>
      tpu.vector_store %arg4[%c0_13, %c0_14], %18 {strides = array<i32>} : memref<2x16xf32, #tpu.memory_space<vmem>>, vector<2x16xf32>,
    } else {
    }
    %c0 = arith.constant 0 : index
    %c0_1 = arith.constant 0 : index
    %3 = vector.load %arg1[%c0, %c0_1] : memref<8x16xf32, #tpu.memory_space<vmem>>, vector<8x16xf32>
    %c0_2 = arith.constant 0 : index
    %c0_3 = arith.constant 0 : index
    %4 = vector.load %arg4[%c0_2, %c0_3] : memref<2x16xf32, #tpu.memory_space<vmem>>, vector<1x16xf32>
    %cst = arith.constant dense<0.000000e+00> : vector<16xf32>
    %5 = vector.multi_reduction <add>, %3, %cst [0] : vector<8x16xf32> to vector<16xf32>
    %6 = vector.shape_cast %5 : vector<16xf32> to vector<1x16xf32>
    %7 = arith.addf %4, %6 : vector<1x16xf32>
    %c0_4 = arith.constant 0 : index
    %c0_5 = arith.constant 0 : index
    %8 = vector.load %arg4[%c0_4, %c0_5] : memref<2x16xf32, #tpu.memory_space<vmem>>, vector<1x16xf32>
    tpu.vector_store %arg4[%c0_4, %c0_5], %7 {strides = array<i32>} : memref<2x16xf32, #tpu.memory_space<vmem>>, vector<1x16xf32>,
    %c1 = arith.constant 1 : index
    %c0_6 = arith.constant 0 : index
    %9 = vector.load %arg4[%c1, %c0_6] : memref<2x16xf32, #tpu.memory_space<vmem>>, vector<1x16xf32>
    %10 = arith.mulf %3, %3 : vector<8x16xf32>
    %cst_7 = arith.constant dense<0.000000e+00> : vector<16xf32>
    %11 = vector.multi_reduction <add>, %10, %cst_7 [0] : vector<8x16xf32> to vector<16xf32>
    %12 = vector.shape_cast %11 : vector<16xf32> to vector<1x16xf32>
    %13 = arith.addf %9, %12 : vector<1x16xf32>
    %c1_8 = arith.constant 1 : index
    %c0_9 = arith.constant 0 : index
    %14 = vector.load %arg4[%c1_8, %c0_9] : memref<2x16xf32, #tpu.memory_space<vmem>>, vector<1x16xf32>
    tpu.vector_store %arg4[%c1_8, %c0_9], %13 {strides = array<i32>} : memref<2x16xf32, #tpu.memory_space<vmem>>, vector<1x16xf32>,
    %c0_i32_10 = arith.constant 0 : i32
    %15 = arith.cmpi eq, %arg0, %c0_i32_10 : i32
    %16 = arith.extui %15 : i1 to i32
    %c0_i32_11 = arith.constant 0 : i32
    %17 = arith.cmpi ne, %16, %c0_i32_11 : i32
    scf.if %17 {
      %c0_12 = arith.constant 0 : index
      %c0_13 = arith.constant 0 : index
      %18 = vector.load %arg4[%c0_12, %c0_13] : memref<2x16xf32, #tpu.memory_space<vmem>>, vector<1x16xf32>
      %cst_14 = arith.constant 1.250000e-01 : f32
      %19 = vector.broadcast %cst_14 : f32 to vector<1x16xf32>
      %20 = arith.mulf %18, %19 : vector<1x16xf32>
      %c1_15 = arith.constant 1 : index
      %c0_16 = arith.constant 0 : index
      %21 = vector.load %arg4[%c1_15, %c0_16] : memref<2x16xf32, #tpu.memory_space<vmem>>, vector<1x16xf32>
      %cst_17 = arith.constant 1.250000e-01 : f32
      %22 = vector.broadcast %cst_17 : f32 to vector<1x16xf32>
      %23 = arith.mulf %21, %22 : vector<1x16xf32>
      %24 = arith.mulf %20, %20 : vector<1x16xf32>
      %25 = arith.subf %23, %24 : vector<1x16xf32>
      %c0_18 = arith.constant 0 : index
      %c0_19 = arith.constant 0 : index
      %26 = vector.load %arg2[%c0_18, %c0_19] : memref<1x16xf32, #tpu.memory_space<vmem>>, vector<1x16xf32>
      %cst_20 = arith.constant 9.99999974E-6 : f32
      %27 = vector.broadcast %cst_20 : f32 to vector<1x16xf32>
      %28 = arith.addf %25, %27 : vector<1x16xf32>
      %29 = math.rsqrt %28 : vector<1x16xf32>
      %30 = arith.mulf %26, %29 : vector<1x16xf32>
      %c0_21 = arith.constant 0 : index
      %c0_22 = arith.constant 0 : index
      %31 = vector.load %arg3[%c0_21, %c0_22] : memref<1x16xf32, #tpu.memory_space<vmem>>, vector<1x16xf32>
      %32 = arith.mulf %20, %30 : vector<1x16xf32>
      %33 = arith.subf %31, %32 : vector<1x16xf32>
      %c0_23 = arith.constant 0 : index
      %c0_24 = arith.constant 0 : index
      %34 = vector.load %arg4[%c0_23, %c0_24] : memref<2x16xf32, #tpu.memory_space<vmem>>, vector<1x16xf32>
      tpu.vector_store %arg4[%c0_23, %c0_24], %30 {strides = array<i32>} : memref<2x16xf32, #tpu.memory_space<vmem>>, vector<1x16xf32>,
      %c1_25 = arith.constant 1 : index
      %c0_26 = arith.constant 0 : index
      %35 = vector.load %arg4[%c1_25, %c0_26] : memref<2x16xf32, #tpu.memory_space<vmem>>, vector<1x16xf32>
      tpu.vector_store %arg4[%c1_25, %c0_26], %33 {strides = array<i32>} : memref<2x16xf32, #tpu.memory_space<vmem>>, vector<1x16xf32>,
    } else {
    }
    return
  }
  func.func @transform_0(%arg0: i32) -> (i32, i32) {
    %c0_i32 = arith.constant 0 : i32
    %c0_i32_0 = arith.constant 0 : i32
    return %arg0, %c0_i32 : i32, i32
  }
  func.func @transform_1(%arg0: i32) -> (i32, i32) {
    %c0_i32 = arith.constant 0 : i32
    %c0_i32_0 = arith.constant 0 : i32
    %c0_i32_1 = arith.constant 0 : i32
    return %c0_i32, %c0_i32_0 : i32, i32
  }
  func.func @transform_2(%arg0: i32) -> (i32, i32) {
    %c0_i32 = arith.constant 0 : i32
    %c0_i32_0 = arith.constant 0 : i32
    %c0_i32_1 = arith.constant 0 : i32
    return %c0_i32, %c0_i32_0 : i32, i32
  }
  func.func @transform_3(%arg0: i32) -> (i32, i32) {
    %c0_i32 = arith.constant 0 : i32
    %c0_i32_0 = arith.constant 0 : i32
    %c0_i32_1 = arith.constant 0 : i32
    return %c0_i32, %c0_i32_0 : i32, i32
  }
}

</mosaic_0001>

<llo_original>
// kernel: tpu_custom_call.1
$region0: #{tpu_custom_call.1}
  #allocation0 [shape = 'u32[]', space=smem, size = 0x4, offset = 0x4, fixed_abs, tag = 'smem constant byte address 0x4 - core index']
  #allocation1 [shape = 'u32[144,128]{1,0:T(1,128)}', space=vmem, size = 0x12000, scoped, tag = 'internal scratch']
  %s0 = inlined_call_operand.hbm [shape: f32[8,16], index: 0, kind: input, shape index: {}]
  %s1 = inlined_call_operand.vmem [shape: f32[1,16], index: 1, kind: input, shape index: {}]
  %s2 = inlined_call_operand.vmem [shape: f32[1,16], index: 2, kind: input, shape index: {}]
  %s3 = inlined_call_operand.hbm [shape: f32[2,16], index: 3, kind: output, shape index: {}]
  %s4 = sld [smem:[#allocation0]]
  $region34: #{tpu_custom_call.1} parent=0
    _
  %s6 = ssub.s32 1, %s4
  %s7 = scalar_select 0, %s6, %s4
  $region1: #{tpu_custom_call.1} parent=0
    #allocation2 [shape = 'u8[4096]{0}', space=vmem, size = 0x1000, scoped, tag = 'input window, operand 0, single buffered']
    #allocation3 [shape = 's32[1]{0}', space=sflag, size = 0x4, scoped, tag = 'scoped memory for tpu_custom_call.1']
    #allocation4 [shape = 's32[1]{0}', space=sflag, size = 0x4, scoped, tag = 'scoped memory for tpu_custom_call.1']
    #allocation5 [shape = 'u8[1024]{0}', space=vmem, size = 0x400, scoped, tag = 'output window, operand 0, single buffered']
    %8 = vsyncpa [#allocation3], 0
    %9 = vsyncpa [#allocation4], 0
    // Predicated region
    $region2: #{tpu_custom_call.1} parent=1 // pred_check
      _
    $region3: #{tpu_custom_call.1} parent=1 // pred_check_branch
      %11 = sbr.rel (0) target = $region5
    $region4: #{tpu_custom_call.1} parent=1 // pred_region
      %s13 = ssub.s32 128, 128
      %14 = vsyncadd [#allocation3], %s13
      %s16 = sshll.u32 [#allocation2], 4
      %s17 = int_to_ptr.vmem [resolvable:$true] %s16
      %19 = dma.hbm_to_vmem [thread:$0]  %s0, 128, %s17, [#allocation3]
    $region5: #{tpu_custom_call.1} parent=1 // pred_fallthru
      _
    // Predicated region
    $region6: #{tpu_custom_call.1} parent=1 // pred_check
      _
    $region7: #{tpu_custom_call.1} parent=1 // pred_check_branch
      %21 = sbr.rel (0) target = $region9
    $region8: #{tpu_custom_call.1} parent=1 // pred_region
      _
    $region9: #{tpu_custom_call.1} parent=1 // pred_fallthru
      _
    // Predicated region
    $region10: #{tpu_custom_call.1} parent=1 // pred_check
      _
    $region11: #{tpu_custom_call.1} parent=1 // pred_check_branch
      %23 = sbr.rel (0) target = $region13
    $region12: #{tpu_custom_call.1} parent=1 // pred_region
      _
    $region13: #{tpu_custom_call.1} parent=1 // pred_fallthru
      _
    // Predicated region
    $region14: #{tpu_custom_call.1} parent=1 // pred_check
      _
    $region15: #{tpu_custom_call.1} parent=1 // pred_check_branch
      %25 = sbr.rel (0) target = $region17
    $region16: #{tpu_custom_call.1} parent=1 // pred_region
      %26 = dma.done [#allocation3], 128
    $region17: #{tpu_custom_call.1} parent=1 // pred_fallthru
      _
    %p27 = scmp.eq.s32.totalorder 0, 0
    // Predicated region
    $region18: #{tpu_custom_call.1} parent=1 // pred_check
      %p28 = pneg %p27
    $region19: #{tpu_custom_call.1} parent=1 // pred_check_branch
      %30 = sbr.rel (%p28) target = $region21
    $region20: #{tpu_custom_call.1} parent=1 // pred_region
      %vm31 = vcmask 123904
      %32 = vst.msk [vmem:[#allocation5] sm:$0x3] %vm31, 0.0
    $region21: #{tpu_custom_call.1} parent=1 // pred_fallthru
      _
    %v33 = vld [vmem:[#allocation2] sm:$0xff]
    %v34 = vld [vmem:[#allocation5] sm:$0x1]
    %vm35 = vcmask 130048
    %v36 = vsel %vm35, %v33, 0.0
    %v37 = vrot.slane %v36, 4
    %v38 = vadd.f32 %v36, %v37
    %v39 = vrot.slane %v38, 2
    %v40 = vadd.f32 %v38, %v39
    %v41 = vrot.slane %v40, 1
    %v42 = vadd.f32 %v40, %v41
    %v43 = vadd.f32 %v34, %v42
    %vm44 = vcmask 122880
    %45 = vst.msk [vmem:[#allocation5] sm:$0x1] %vm44, %v43
    %v46 = vld [vmem:[#allocation5 + $0x1] sm:$0x1]
    %v47 = vmul.f32 %v33, %v33
    %v48 = vsel %vm35, %v47, 0.0
    %v49 = vrot.slane %v48, 4
    %v50 = vadd.f32 %v48, %v49
    %v51 = vrot.slane %v50, 2
    %v52 = vadd.f32 %v50, %v51
    %v53 = vrot.slane %v52, 1
    %v54 = vadd.f32 %v52, %v53
    %v55 = vadd.f32 %v46, %v54
    %56 = vst.msk [vmem:[#allocation5 + $0x1] sm:$0x1] %vm44, %v55
    // Predicated region
    $region22: #{tpu_custom_call.1} parent=1 // pred_check
      %p57 = pneg %p27
    $region23: #{tpu_custom_call.1} parent=1 // pred_check_branch
      %59 = sbr.rel (%p57) target = $region25
    $region24: #{tpu_custom_call.1} parent=1 // pred_region
      %v60 = vld [vmem:[#allocation5] sm:$0x1]
      %v61 = vmul.f32 %v60, 0.125
      %v62 = vld [vmem:[#allocation5 + $0x1] sm:$0x1]
      %v63 = vmul.f32 %v62, 0.125
      %v64 = vmul.f32 %v61, %v61
      %v65 = vsub.f32 %v63, %v64
      %v66 = vld [vmem:[%s1] sm:$0x1]
      %v67 = vadd.f32 %v65, 1e-05
      %v68 = vrsqrt.pop %v67
      %v69 = vmul.f32 %v66, %v68
      %v70 = vld [vmem:[%s2] sm:$0x1]
      %v71 = vmul.f32 %v61, %v69
      %v72 = vsub.f32 %v70, %v71
      %73 = vst.msk [vmem:[#allocation5] sm:$0x1] %vm44, %v69
      %74 = vst.msk [vmem:[#allocation5 + $0x1] sm:$0x1] %vm44, %v72
    $region25: #{tpu_custom_call.1} parent=1 // pred_fallthru
      _
    // Predicated region
    $region26: #{tpu_custom_call.1} parent=1 // pred_check
      _
    $region27: #{tpu_custom_call.1} parent=1 // pred_check_branch
      %76 = sbr.rel (0) target = $region29
    $region28: #{tpu_custom_call.1} parent=1 // pred_region
      %s78 = ssub.s32 32, 32
      %79 = vsyncadd [#allocation4], %s78
      %s81 = sshll.u32 [#allocation5], 4
      %s82 = int_to_ptr.vmem [resolvable:$true] %s81
      %84 = dma.vmem_to_hbm [thread:$0]  %s82, 32, %s3, [#allocation4]
    $region29: #{tpu_custom_call.1} parent=1 // pred_fallthru
      _
    // Predicated region
    $region30: #{tpu_custom_call.1} parent=1 // pred_check
      _
    $region31: #{tpu_custom_call.1} parent=1 // pred_check_branch
      %86 = sbr.rel (0) target = $region33
    $region32: #{tpu_custom_call.1} parent=1 // pred_region
      %87 = dma.done [#allocation4], 32
    $region33: #{tpu_custom_call.1} parent=1 // pred_fallthru
      _
    %88 = vsyncpa [#allocation3], 1
    %89 = vsyncpa [#allocation4], 1

</llo_original>
